<compile_context>
chip_gen: v7x
topology: tpu7x:2x2x1
jax: 0.10.0
libtpu: 0.0.40
codegen_flags: <defaults>
</compile_context>

<pallas_src>
import functools

import jax
import jax.numpy as jnp
from jax import lax
from jax.experimental import pallas as pl
from jax.experimental.pallas import tpu as pltpu


def _gated_conv_kernel(x_ref, xh_ref, w_ref, b_ref, o_ref, *, kernel, dilation,
                       compute_dtype):
    # x_ref  : (1, C, TL_in)   main input tile (TL_in >= TL)
    # xh_ref : (1, C, H)       halo slab (next lanes of the same input)
    # w_ref  : (2C, K*C)       fused f+g block-diagonal weights (tap-major)
    # b_ref  : (2C, 1)         fused bias, float32
    # o_ref  : (1, C, TL)      lane-dense output tile
    C = o_ref.shape[1]
    TL = o_ref.shape[2]

    x_main = x_ref[0]
    if compute_dtype is not None:
        x_main = x_main.astype(compute_dtype)

    if kernel > 1:
        x_halo = xh_ref[0]
        if compute_dtype is not None:
            x_halo = x_halo.astype(compute_dtype)
        x_win = jnp.concatenate([x_main, x_halo], axis=-1)
        # im2col: stack the K dilated shifts along channels -> one MXU dot.
        rhs = jnp.concatenate(
            [x_win[:, k * dilation:k * dilation + TL] for k in range(kernel)],
            axis=0)                                          # (K*C, TL)
    else:
        rhs = x_main[:, :TL]                                 # (C, TL)

    acc = jnp.dot(w_ref[...], rhs, preferred_element_type=jnp.float32)
    acc = acc + b_ref[...]                                   # (2C, TL) + (2C, 1)

    # Gating epilogue in float32 (v5e has no bf16 VPU/EUP path).
    f = jnp.tanh(acc[:C, :])
    g = 0.5 * (jnp.tanh(0.5 * acc[C:, :]) + 1.0)             # sigmoid via tanh
    o_ref[0] = (f * g).astype(o_ref.dtype)


def _fused_weights(wf, wg, groups):
    """(C, Cg, K) x2 -> (2C, K*C) block-diag fused weights, tap-major columns."""
    C, Cg, K = wf.shape
    w = jnp.concatenate([wf, wg], axis=0)          # (2C, Cg, K)
    wt = jnp.transpose(w, (2, 0, 1))               # (K, 2C, Cg)
    W = jnp.zeros((K, 2 * C, C), wt.dtype)
    for blk in range(2 * groups):
        g = blk % groups                           # input-channel group
        W = W.at[:, blk * Cg:(blk + 1) * Cg, g * Cg:(g + 1) * Cg].set(
            wt[:, blk * Cg:(blk + 1) * Cg, :])
    # (K, 2C, C) -> (2C, K*C): column block k holds tap k's weights.
    return jnp.transpose(W, (1, 0, 2)).reshape(2 * C, K * C)


def gated_conv(x, wf, bf, wg, bg, *, kernel, dilation, groups,
               tile_l=8192, compute_dtype=None):
    N, C, L = x.shape
    assert C % groups == 0, "channels must be divisible by groups"
    Cg = C // groups
    assert wf.shape == (C, Cg, kernel) and wg.shape == (C, Cg, kernel)
    halo = dilation * (kernel - 1)
    assert L > halo, "sequence too short for this kernel/dilation"
    L_out = L - halo

    W2 = _fused_weights(wf, wg, groups)
    if compute_dtype is not None:
        W2 = W2.astype(compute_dtype)              # tiny, cheap
    b2 = jnp.concatenate([bf, bg]).reshape(2 * C, 1).astype(jnp.float32)

    HALO_BLK = max(128, pl.cdiv(halo, 128) * 128)

    kfn = functools.partial(_gated_conv_kernel, kernel=kernel,
                            dilation=dilation, compute_dtype=compute_dtype)

    if L_out >= HALO_BLK:
        # ---- tiled path: lane-dense 128-multiple tiles; ragged tail masked.
        TL = max(HALO_BLK, (min(tile_l, L_out) // HALO_BLK) * HALO_BLK)
        num_tiles = pl.cdiv(L_out, TL)
        hbpt = TL // HALO_BLK
        last_halo_blk = (L - 1) // HALO_BLK        # keep halo DMA in bounds

        def x_map(i):
            return (i // num_tiles, 0, i % num_tiles)

        def halo_map(i):
            l = i % num_tiles
            return (i // num_tiles, 0,
                    jnp.minimum((l + 1) * hbpt, last_halo_blk))

        in_specs = [
            pl.BlockSpec((1, C, TL), x_map),                       # main tile
            pl.BlockSpec((1, C, HALO_BLK), halo_map),              # halo slab
            pl.BlockSpec((2 * C, kernel * C), lambda i: (0, 0)),   # weights
            pl.BlockSpec((2 * C, 1), lambda i: (0, 0)),            # bias
        ]
        out_spec = pl.BlockSpec((1, C, TL), x_map)
        grid = (N * num_tiles,)                    # flat parallel axis
    else:
        # ---- tiny-L path: one full-array block per batch element.
        TL = L_out
        in_specs = [
            pl.BlockSpec((1, C, L), lambda i: (i, 0, 0)),
            pl.BlockSpec((1, C, L), lambda i: (i, 0, 0)),
            pl.BlockSpec((2 * C, kernel * C), lambda i: (0, 0)),
            pl.BlockSpec((2 * C, 1), lambda i: (0, 0)),
        ]
        out_spec = pl.BlockSpec((1, C, L_out), lambda i: (i, 0, 0))
        grid = (N,)

    # Rough per-step VMEM budget: double-buffered in/out tiles + in-kernel
    # temporaries (x_win, im2col rhs, f32 acc, epilogue temps) + slack.
    est = int(C * TL * 4 * (2 + 2 + 1 + kernel + 2 + 3))
    vmem_limit = int(min(max(est, 32 * 1024 * 1024), 64 * 1024 * 1024))

    return pl.pallas_call(
        kfn,
        out_shape=jax.ShapeDtypeStruct((N, C, L_out), x.dtype),
        grid=grid,
        in_specs=in_specs,
        out_specs=out_spec,
        compiler_params=pltpu.CompilerParams(
            dimension_semantics=("parallel",),
            vmem_limit_bytes=vmem_limit),
    )(x, x, W2, b2)


def _reference(x, wf, bf, wg, bg, *, dilation, groups):
    def conv(w, b):
        y = lax.conv_general_dilated(
            x, w, window_strides=(1,), padding="VALID",
            rhs_dilation=(dilation,),
            dimension_numbers=("NCH", "OIH", "NCH"),
            feature_group_count=groups)
        return y + b[None, :, None]
    return jnp.tanh(conv(wf, bf)) * jax.nn.sigmoid(conv(wg, bg))


if __name__ == "__main__":
    # Module config: GatedConv(dim=16, kernel=3, groups=2, dilation=2, down=True)
    dim, kernel, groups, dilation = 16, 3, 2, 2
    Cg = dim // groups

    key = jax.random.PRNGKey(0)
    kx, kwf, kbf, kwg, kbg = jax.random.split(key, 5)

    # PyTorch Conv1d default init: U(-1/sqrt(fan_in)), fan_in = (dim/groups)*K.
    bound = 1.0 / (Cg * kernel) ** 0.5
    wf = jax.random.uniform(kwf, (dim, Cg, kernel), jnp.float32, -bound, bound)
    bf = jax.random.uniform(kbf, (dim,), jnp.float32, -bound, bound)
    wg = jax.random.uniform(kwg, (dim, Cg, kernel), jnp.float32, -bound, bound)
    bg = jax.random.uniform(kbg, (dim,), jnp.float32, -bound, bound)

    # Case 1: tiny input -> single full-array block path.
    x1 = jax.random.normal(kx, (2, dim, 32), dtype=jnp.float32)
    out1 = jax.block_until_ready(
        gated_conv(x1, wf, bf, wg, bg,
                   kernel=kernel, dilation=dilation, groups=groups))
    ref1 = _reference(x1, wf, bf, wg, bg, dilation=dilation, groups=groups)
    assert out1.shape == ref1.shape
    assert jnp.allclose(out1, ref1, atol=1e-5, rtol=1e-5)

    # Case 2: longer input, default tiling (TL=256 -> 2 tiles/batch, ragged tail).
    x2 = jax.random.normal(jax.random.PRNGKey(1), (2, dim, 300),
                           dtype=jnp.float32)
    out2 = jax.block_until_ready(
        gated_conv(x2, wf, bf, wg, bg,
                   kernel=kernel, dilation=dilation, groups=groups))
    ref2 = _reference(x2, wf, bf, wg, bg, dilation=dilation, groups=groups)
    assert out2.shape == ref2.shape
    assert jnp.allclose(out2, ref2, atol=1e-5, rtol=1e-5)

    # Case 3: small explicit tile -> exercises halo clamp + masked ragged tail.
    out3 = jax.block_until_ready(
        gated_conv(x2, wf, bf, wg, bg,
                   kernel=kernel, dilation=dilation, groups=groups, tile_l=128))
    assert jnp.allclose(out3, ref2, atol=1e-5, rtol=1e-5)

    # Case 4: bf16 MXU inputs (cast inside the kernel), f32 accumulation.
    out4 = jax.block_until_ready(
        gated_conv(x2, wf, bf, wg, bg,
                   kernel=kernel, dilation=dilation, groups=groups,
                   compute_dtype=jnp.bfloat16))
    assert jnp.allclose(out4, ref2, atol=5e-2, rtol=5e-2)

    print("KERNEL_OK")
</pallas_src>

<mosaic_0001>
module attributes {stable_mosaic.version = 11 : i64} {
  func.func @_gated_conv_kernel(%arg0: i32, %arg1: memref<1x16x32xf32, #tpu.memory_space<vmem>>, %arg2: memref<1x16x32xf32, #tpu.memory_space<vmem>>, %arg3: memref<32x48xf32, #tpu.memory_space<vmem>>, %arg4: memref<32x1xf32, #tpu.memory_space<vmem>>, %arg5: memref<1x16x28xf32, #tpu.memory_space<vmem>>) attributes {dimension_semantics = [#tpu.dimension_semantics<parallel>], iteration_bounds = array<i64: 2>, scalar_prefetch = 0 : i64, scratch_operands = 0 : i64, tpu.core_type = #tpu.core_type<tc>, window_params = [{transform_indices = @transform_0, window_bounds = array<i64: 1, 16, 32>}, {transform_indices = @transform_1, window_bounds = array<i64: 1, 16, 32>}, {pipeline_mode = #tpu.pipeline_mode<synchronous>, transform_indices = @transform_2, window_bounds = array<i64: 32, 48>}, {pipeline_mode = #tpu.pipeline_mode<synchronous>, transform_indices = @transform_3, window_bounds = array<i64: 32, 1>}, {transform_indices = @transform_4, window_bounds = array<i64: 1, 16, 28>}]} {
    %c0 = arith.constant 0 : index
    %c0_0 = arith.constant 0 : index
    %c0_1 = arith.constant 0 : index
    %0 = vector.load %arg1[%c0, %c0_0, %c0_1] : memref<1x16x32xf32, #tpu.memory_space<vmem>>, vector<1x16x32xf32>
    %1 = vector.shape_cast %0 : vector<1x16x32xf32> to vector<16x32xf32>
    %c0_2 = arith.constant 0 : index
    %c0_3 = arith.constant 0 : index
    %c0_4 = arith.constant 0 : index
    %2 = vector.load %arg2[%c0_2, %c0_3, %c0_4] : memref<1x16x32xf32, #tpu.memory_space<vmem>>, vector<1x16x32xf32>
    %3 = vector.shape_cast %2 : vector<1x16x32xf32> to vector<16x32xf32>
    %4 = tpu.concatenate %1, %3 in 1 : vector<16x32xf32>, vector<16x32xf32> -> vector<16x64xf32>
    %5 = vector.extract_strided_slice %4 {offsets = [0, 0], sizes = [16, 28], strides = [1, 1]} : vector<16x64xf32> to vector<16x28xf32>
    %6 = vector.extract_strided_slice %4 {offsets = [0, 2], sizes = [16, 28], strides = [1, 1]} : vector<16x64xf32> to vector<16x28xf32>
    %7 = vector.extract_strided_slice %4 {offsets = [0, 4], sizes = [16, 28], strides = [1, 1]} : vector<16x64xf32> to vector<16x28xf32>
    %8 = tpu.concatenate %5, %6, %7 in 0 : vector<16x28xf32>, vector<16x28xf32>, vector<16x28xf32> -> vector<48x28xf32>
    %c0_5 = arith.constant 0 : index
    %c0_6 = arith.constant 0 : index
    %9 = vector.load %arg3[%c0_5, %c0_6] : memref<32x48xf32, #tpu.memory_space<vmem>>, vector<32x48xf32>
    %cst = arith.constant dense<0.000000e+00> : vector<32x28xf32>
    %10 = tpu.matmul %9, %8, %cst {dimension_numbers = #tpu.dot_dimension_numbers<[1], [0], [0], [1], [0, 0, 1, 1], [], []>} : vector<32x48xf32>, vector<48x28xf32>, vector<32x28xf32> -> vector<32x28xf32>
    %c0_7 = arith.constant 0 : index
    %c0_8 = arith.constant 0 : index
    %11 = vector.load %arg4[%c0_7, %c0_8] : memref<32x1xf32, #tpu.memory_space<vmem>>, vector<32x1xf32>
    %12 = vector.broadcast %11 : vector<32x1xf32> to vector<32x28xf32>
    %13 = arith.addf %10, %12 : vector<32x28xf32>
    %14 = vector.extract_strided_slice %13 {offsets = [0, 0], sizes = [16, 28], strides = [1, 1]} : vector<32x28xf32> to vector<16x28xf32>
    %15 = math.tanh %14 : vector<16x28xf32>
    %16 = vector.extract_strided_slice %13 {offsets = [16, 0], sizes = [16, 28], strides = [1, 1]} : vector<32x28xf32> to vector<16x28xf32>
    %cst_9 = arith.constant 5.000000e-01 : f32
    %17 = vector.broadcast %cst_9 : f32 to vector<16x28xf32>
    %18 = arith.mulf %17, %16 : vector<16x28xf32>
    %19 = math.tanh %18 : vector<16x28xf32>
    %cst_10 = arith.constant 1.000000e+00 : f32
    %20 = vector.broadcast %cst_10 : f32 to vector<16x28xf32>
    %21 = arith.addf %19, %20 : vector<16x28xf32>
    %cst_11 = arith.constant 5.000000e-01 : f32
    %22 = vector.broadcast %cst_11 : f32 to vector<16x28xf32>
    %23 = arith.mulf %22, %21 : vector<16x28xf32>
    %24 = arith.mulf %15, %23 : vector<16x28xf32>
    %c0_12 = arith.constant 0 : index
    %c0_13 = arith.constant 0 : index
    %c0_14 = arith.constant 0 : index
    %25 = vector.load %arg5[%c0_12, %c0_13, %c0_14] : memref<1x16x28xf32, #tpu.memory_space<vmem>>, vector<1x16x28xf32>
    %26 = vector.shape_cast %25 : vector<1x16x28xf32> to vector<16x28xf32>
    %27 = vector.shape_cast %24 : vector<16x28xf32> to vector<1x16x28xf32>
    tpu.vector_store %arg5[%c0_12, %c0_13, %c0_14], %27 {strides = array<i32>} : memref<1x16x28xf32, #tpu.memory_space<vmem>>, vector<1x16x28xf32>,
    return
  }
  func.func @transform_0(%arg0: i32) -> (i32, i32, i32) {
    %c0_i32 = arith.constant 0 : i32
    %c0_i32_0 = arith.constant 0 : i32
    %c0_i32_1 = arith.constant 0 : i32
    return %arg0, %c0_i32, %c0_i32_0 : i32, i32, i32
  }
  func.func @transform_1(%arg0: i32) -> (i32, i32, i32) {
    %c0_i32 = arith.constant 0 : i32
    %c0_i32_0 = arith.constant 0 : i32
    %c0_i32_1 = arith.constant 0 : i32
    return %arg0, %c0_i32, %c0_i32_0 : i32, i32, i32
  }
  func.func @transform_2(%arg0: i32) -> (i32, i32) {
    %c0_i32 = arith.constant 0 : i32
    %c0_i32_0 = arith.constant 0 : i32
    %c0_i32_1 = arith.constant 0 : i32
    return %c0_i32, %c0_i32_0 : i32, i32
  }
  func.func @transform_3(%arg0: i32) -> (i32, i32) {
    %c0_i32 = arith.constant 0 : i32
    %c0_i32_0 = arith.constant 0 : i32
    %c0_i32_1 = arith.constant 0 : i32
    return %c0_i32, %c0_i32_0 : i32, i32
  }
  func.func @transform_4(%arg0: i32) -> (i32, i32, i32) {
    %c0_i32 = arith.constant 0 : i32
    %c0_i32_0 = arith.constant 0 : i32
    %c0_i32_1 = arith.constant 0 : i32
    return %arg0, %c0_i32, %c0_i32_0 : i32, i32, i32
  }
}

</mosaic_0001>

<llo_original>
// kernel: tpu_custom_call.1
$region0: #{tpu_custom_call.1}
  #allocation0 [shape = 'u32[]', space=smem, size = 0x4, offset = 0x4, fixed_abs, tag = 'smem constant byte address 0x4 - core index']
  #allocation1 [shape = 'u32[144,128]{1,0:T(1,128)}', space=vmem, size = 0x12000, scoped, tag = 'internal scratch']
  %s0 = inlined_call_operand.vmem [shape: f32[2,16,32], index: 0, kind: input, shape index: {}]
  %s1 = inlined_call_operand.hbm [shape: f32[2,16,32], index: 1, kind: input, shape index: {}]
  %s2 = inlined_call_operand.hbm [shape: f32[32,48], index: 2, kind: input, shape index: {}]
  %s3 = inlined_call_operand.vmem [shape: f32[32,1], index: 3, kind: input, shape index: {}]
  %s4 = inlined_call_operand.hbm [shape: f32[2,16,28], index: 4, kind: output, shape index: {}]
  %s5 = sld [smem:[#allocation0]]
  $region57: #{tpu_custom_call.1} parent=0
    _
  %s7 = ssub.s32 1, %s5
  %s8 = scalar_select 0, %s7, %s5
  $region1: #{tpu_custom_call.1} parent=0
    #allocation2 [shape = 'u8[16384]{0}', space=vmem, size = 0x4000, scoped, tag = 'input window, operand 1']
    #allocation3 [shape = 's32[2]{0}', space=sflag, size = 0x8, scoped, tag = 'scoped memory for tpu_custom_call.1']
    #allocation4 [shape = 's32[2]{0}', space=sflag, size = 0x8, scoped, tag = 'scoped memory for tpu_custom_call.1']
    #allocation5 [shape = 'u8[16384]{0}', space=vmem, size = 0x4000, scoped, tag = 'input window, operand 2, single buffered']
    #allocation6 [shape = 's32[1]{0}', space=sflag, size = 0x4, scoped, tag = 'scoped memory for tpu_custom_call.1']
    #allocation7 [shape = 'u8[16384]{0}', space=vmem, size = 0x4000, scoped, tag = 'output window, operand 0']
    %9 = vsyncpa [#allocation3], 0
    %s10 = scalar_lea.sflag [#allocation3], 1
    %11 = vsyncpa %s10, 0
    %12 = vsyncpa [#allocation6], 0
    %13 = vsyncpa [#allocation4], 0
    %s14 = scalar_lea.sflag [#allocation4], 1
    %15 = vsyncpa %s14, 0
    loop: start=0, step=1, limit=4
    $region2: #{tpu_custom_call.1} parent=1 // loop_pre_header
      _
    $region3: #{tpu_custom_call.1} parent=1 // loop_header
      %s17 = sphi 0, %s21
      %p18 = scmp.ge.s32.totalorder %s17, 4
      %s27 = sphi 0, %s29
      %s30 = sphi 0, %s27
      %s31 = sphi 0, %s30
      %s47 = sphi 0, %s31
      %s53 = sphi 0, %s55
      %s56 = sphi 0, %s53
      %s57 = sphi 0, %s56
      %s73 = sphi 0, %s57
      %s77 = sphi 0, %s77
      %s79 = sphi 0, %s77
      %s80 = sphi 0, %s79
      %s94 = sphi 0, %s80
      %s98 = sphi 0, %s98
      %s100 = sphi 0, %s98
      %s101 = sphi 0, %s100
      %s115 = sphi 0, %s101
      %s121 = sphi 0, %s123
      %s124 = sphi 0, %s121
      %s125 = sphi 0, %s124
      %s141 = sphi 0, %s125
    $region4: #{tpu_custom_call.1} parent=1 // loop_header_branch
      %20 = sbr.rel (%p18) target = $region8
    $region5: #{tpu_custom_call.1} parent=1 // loop_body
      %s22 = ssub.s32 %s17, 1
      %s23 = ssub.s32 %s17, 2
      %s24 = sadd.s32 %s17, 1
      %s25 = ssub.s32 %s17, %s24
      %p26 = scmp.eq.s32.totalorder %s25, 0
      %s28 = sadd.s32 %s27, 1
      %s29 = scalar_select %p26, %s27, %s28
      %p32 = pneg %p26
      %p33 = scmp.eq.s32.totalorder %s17, 1
      %p34 = por %p32, %p33
      %p35 = scmp.ne.s32.totalorder %s27, %s30
      %p36 = scmp.eq.s32.totalorder %s17, 0
      %p37 = por %p35, %p36
      %p38 = scmp.ne.s32.totalorder %s27, %s30
      %p39 = scmp.eq.s32.totalorder %s22, 1
      %p40 = por %p38, %p39
      %p41 = scmp.ne.s32.totalorder %s30, %s31
      %p42 = scmp.eq.s32.totalorder %s22, 0
      %p43 = por %p41, %p42
      %p44 = scmp.ne.s32.totalorder %s30, %s31
      %p45 = scmp.eq.s32.totalorder %s23, 1
      %p46 = por %p44, %p45
      %p48 = scmp.ne.s32.totalorder %s31, %s47
      %p49 = scmp.eq.s32.totalorder %s23, 0
      %p50 = por %p48, %p49
      %s51 = ssub.s32 %s17, %s24
      %p52 = scmp.eq.s32.totalorder %s51, 0
      %s54 = sadd.s32 %s53, 1
      %s55 = scalar_select %p52, %s53, %s54
      %p58 = pneg %p52
      %p59 = scmp.eq.s32.totalorder %s17, 1
      %p60 = por %p58, %p59
      %p61 = scmp.ne.s32.totalorder %s53, %s56
      %p62 = scmp.eq.s32.totalorder %s17, 0
      %p63 = por %p61, %p62
      %p64 = scmp.ne.s32.totalorder %s53, %s56
      %p65 = scmp.eq.s32.totalorder %s22, 1
      %p66 = por %p64, %p65
      %p67 = scmp.ne.s32.totalorder %s56, %s57
      %p68 = scmp.eq.s32.totalorder %s22, 0
      %p69 = por %p67, %p68
      %p70 = scmp.ne.s32.totalorder %s56, %s57
      %p71 = scmp.eq.s32.totalorder %s23, 1
      %p72 = por %p70, %p71
      %p74 = scmp.ne.s32.totalorder %s57, %s73
      %p75 = scmp.eq.s32.totalorder %s23, 0
      %p76 = por %p74, %p75
      %s78 = sadd.s32 %s77, 1
      %p81 = scmp.eq.s32.totalorder %s17, 1
      %p82 = scmp.ne.s32.totalorder %s77, %s79
      %p83 = scmp.eq.s32.totalorder %s17, 0
      %p84 = por %p82, %p83
      %p85 = scmp.ne.s32.totalorder %s77, %s79
      %p86 = scmp.eq.s32.totalorder %s22, 1
      %p87 = por %p85, %p86
      %p88 = scmp.ne.s32.totalorder %s79, %s80
      %p89 = scmp.eq.s32.totalorder %s22, 0
      %p90 = por %p88, %p89
      %p91 = scmp.ne.s32.totalorder %s79, %s80
      %p92 = scmp.eq.s32.totalorder %s23, 1
      %p93 = por %p91, %p92
      %p95 = scmp.ne.s32.totalorder %s80, %s94
      %p96 = scmp.eq.s32.totalorder %s23, 0
      %p97 = por %p95, %p96
      %s99 = sadd.s32 %s98, 1
      %p102 = scmp.eq.s32.totalorder %s17, 1
      %p103 = scmp.ne.s32.totalorder %s98, %s100
      %p104 = scmp.eq.s32.totalorder %s17, 0
      %p105 = por %p103, %p104
      %p106 = scmp.ne.s32.totalorder %s98, %s100
      %p107 = scmp.eq.s32.totalorder %s22, 1
      %p108 = por %p106, %p107
      %p109 = scmp.ne.s32.totalorder %s100, %s101
      %p110 = scmp.eq.s32.totalorder %s22, 0
      %p111 = por %p109, %p110
      %p112 = scmp.ne.s32.totalorder %s100, %s101
      %p113 = scmp.eq.s32.totalorder %s23, 1
      %p114 = por %p112, %p113
      %p116 = scmp.ne.s32.totalorder %s101, %s115
      %p117 = scmp.eq.s32.totalorder %s23, 0
      %p118 = por %p116, %p117
      %s119 = ssub.s32 %s17, %s24
      %p120 = scmp.eq.s32.totalorder %s119, 0
      %s122 = sadd.s32 %s121, 1
      %s123 = scalar_select %p120, %s121, %s122
      %p126 = pneg %p120
      %p127 = scmp.eq.s32.totalorder %s17, 1
      %p128 = por %p126, %p127
      %p129 = scmp.ne.s32.totalorder %s121, %s124
      %p130 = scmp.eq.s32.totalorder %s17, 0
      %p131 = por %p129, %p130
      %p132 = scmp.ne.s32.totalorder %s121, %s124
      %p133 = scmp.eq.s32.totalorder %s22, 1
      %p134 = por %p132, %p133
      %p135 = scmp.ne.s32.totalorder %s124, %s125
      %p136 = scmp.eq.s32.totalorder %s22, 0
      %p137 = por %p135, %p136
      %p138 = scmp.ne.s32.totalorder %s124, %s125
      %p139 = scmp.eq.s32.totalorder %s23, 1
      %p140 = por %p138, %p139
      %p142 = scmp.ne.s32.totalorder %s125, %s141
      %p143 = scmp.eq.s32.totalorder %s23, 0
      %p144 = por %p142, %p143
      %p145 = scmp.le.s32.totalorder 1, %s17
      %p146 = scmp.lt.s32.totalorder %s17, 3
      %p147 = pnand %p145, %p146
      %p148 = pneg %p147
      // Predicated region
      $region9: #{tpu_custom_call.1} parent=5 // pred_check
        _
      $region10: #{tpu_custom_call.1} parent=5 // pred_check_branch
        %150 = sbr.rel (%p147) target = $region12
      $region11: #{tpu_custom_call.1} parent=5 // pred_region
        %s151 = ssub.s32 %s17, 1
        // Predicated region
        $region13: #{tpu_custom_call.1} parent=11 // pred_check
          %p152 = pneg %p90
        $region14: #{tpu_custom_call.1} parent=11 // pred_check_branch
          %154 = sbr.rel (%p152) target = $region16
        $region15: #{tpu_custom_call.1} parent=11 // pred_region
          %s156 = ssub.s32 512, 512
          %157 = vsyncadd [#allocation6], %s156
          %s158 = sshll.u32 [#allocation5], 4
          %s159 = int_to_ptr.vmem [resolvable:$true] %s158
          %164 = dma.hbm_to_vmem [thread:$0]  %s2, 512, %s159, [#allocation6], 128, 128, 8
        $region16: #{tpu_custom_call.1} parent=11 // pred_fallthru
          _
        // Predicated region
        $region17: #{tpu_custom_call.1} parent=11 // pred_check
          %p165 = pneg %p111
        $region18: #{tpu_custom_call.1} parent=11 // pred_check_branch
          %167 = sbr.rel (%p165) target = $region20
        $region19: #{tpu_custom_call.1} parent=11 // pred_region
          _
        $region20: #{tpu_custom_call.1} parent=11 // pred_fallthru
          _
      $region12: #{tpu_custom_call.1} parent=5 // pred_fallthru
        _
      %p168 = scmp.lt.s32.totalorder %s17, 2
      // Predicated region
      $region21: #{tpu_custom_call.1} parent=5 // pred_check
        %p169 = pneg %p168
      $region22: #{tpu_custom_call.1} parent=5 // pred_check_branch
        %171 = sbr.rel (%p169) target = $region24
      $region23: #{tpu_custom_call.1} parent=5 // pred_region
        // Predicated region
        $region25: #{tpu_custom_call.1} parent=23 // pred_check
          %p172 = pneg %p37
        $region26: #{tpu_custom_call.1} parent=23 // pred_check_branch
          %174 = sbr.rel (%p172) target = $region28
        $region27: #{tpu_custom_call.1} parent=23 // pred_region
          %p175 = scmp.lt.s32.totalorder %s17, 1
          %s176 = scalar_select %p175, %s17, 1
          %s177 = smul.addr %s176, 2
          %s178 = smul.addr %s177, 8
          %s179 = scalar_lea.vmem %s0, %s178
        $region28: #{tpu_custom_call.1} parent=23 // pred_fallthru
          _
        // Predicated region
        $region29: #{tpu_custom_call.1} parent=23 // pred_check
          %p180 = pneg %p63
        $region30: #{tpu_custom_call.1} parent=23 // pred_check_branch
          %182 = sbr.rel (%p180) target = $region32
        $region31: #{tpu_custom_call.1} parent=23 // pred_region
          %s183 = sand.u32 %s53, 1
          %s184 = scalar_lea.sflag [#allocation3], %s183
          %s185 = sand.u32 %s53, 1
          %s186 = smul.addr %s185, 16
          %s187 = scalar_lea.vmem [#allocation2], %s186
          %s189 = ssub.s32 256, 256
          %190 = vsyncadd %s184, %s189
          %s191 = smul.addr %s17, 2
          %s192 = smul.addr %s191, 128
          %s193 = scalar_lea.hbm %s1, %s192
          %s194 = sshll.u32 %s187, 4
          %s195 = int_to_ptr.vmem [resolvable:$true] %s194
          %200 = dma.hbm_to_vmem [thread:$0]  %s193, 256, %s195, %s184, 128, 128, 8
        $region32: #{tpu_custom_call.1} parent=23 // pred_fallthru
          _
      $region24: #{tpu_custom_call.1} parent=5 // pred_fallthru
        _
      %p201 = scmp.le.s32.totalorder 1, %s17
      %p202 = scmp.lt.s32.totalorder %s17, 3
      %p203 = pnand %p201, %p202
      %p204 = pneg %p203
      // Predicated region
      $region33: #{tpu_custom_call.1} parent=5 // pred_check
        _
      $region34: #{tpu_custom_call.1} parent=5 // pred_check_branch
        %206 = sbr.rel (%p203) target = $region36
      $region35: #{tpu_custom_call.1} parent=5 // pred_region
        %s207 = ssub.s32 %s17, 1
        %s208 = sand.u32 %s56, 1
        %s209 = scalar_lea.sflag [#allocation3], %s208
        %s210 = sand.u32 %s56, 1
        %s211 = smul.addr %s210, 16
        %s212 = scalar_lea.vmem [#allocation2], %s211
        // Predicated region
        $region37: #{tpu_custom_call.1} parent=35 // pred_check
          %p213 = pneg %p69
        $region38: #{tpu_custom_call.1} parent=35 // pred_check_branch
          %215 = sbr.rel (%p213) target = $region40
        $region39: #{tpu_custom_call.1} parent=35 // pred_region
          %216 = dma.done %s209, 256
        $region40: #{tpu_custom_call.1} parent=35 // pred_fallthru
          _
        // Predicated region
        $region41: #{tpu_custom_call.1} parent=35 // pred_check
          %p217 = pneg %p90
        $region42: #{tpu_custom_call.1} parent=35 // pred_check_branch
          %219 = sbr.rel (%p217) target = $region44
        $region43: #{tpu_custom_call.1} parent=35 // pred_region
          %220 = dma.done [#allocation6], 512
        $region44: #{tpu_custom_call.1} parent=35 // pred_fallthru
          _
        %p221 = scmp.lt.s32.totalorder %s22, 1
        %s222 = scalar_select %p221, %s22, 1
        %s223 = smul.addr %s222, 2
        %s224 = smul.addr %s223, 8
        %s225 = scalar_lea.vmem %s0, %s224
        %p226 = pneg %p43
        %p227 = pneg %p40
        %s228 = sand.u32 %s56, 1
        %s229 = scalar_lea.sflag [#allocation3], %s228
        %s230 = sand.u32 %s56, 1
        %s231 = smul.addr %s230, 16
        %s232 = scalar_lea.vmem [#allocation2], %s231
        %p233 = pneg %p69
        %p234 = pneg %p66
        %p235 = pneg %p90
        %p236 = pneg %p87
        %p237 = pneg %p111
        %p238 = pneg %p108
        %p239 = pneg %p137
        %p240 = pneg %p134
        %s241 = sand.u32 %s124, 1
        %s242 = scalar_lea.sflag [#allocation4], %s241
        %s243 = sand.u32 %s124, 1
        %s244 = smul.addr %s243, 16
        %s245 = scalar_lea.vmem [#allocation7], %s244
        %p246 = scmp.lt.s32.totalorder %s22, 1
        %s247 = scalar_select %p246, %s22, 1
        %s248 = smul.addr %s247, 2
        %s249 = smul.addr %s248, 8
        %s250 = scalar_lea.vmem %s0, %s249
        %v251 = vld [vmem:[%s250] sm:$0xff]
        %v252 = vld [vmem:[%s250 + $0x8] sm:$0xff]
        %v253 = vld [vmem:[%s212] sm:$0xff]
        %v254 = vld [vmem:[%s212 + $0x8] sm:$0xff]
        %257 = vrot.lane.b32.xlu0 %v253, 32
        %v258 = vpop.permute.xlu0 %257
        %259 = vrot.lane.b32.xlu0 %v254, 32
        %v260 = vpop.permute.xlu0 %259
        %vm263 = vcmask 261120
        %v264 = vsel %vm263, %v251, %v258
        %v265 = vsel %vm263, %v252, %v260
        %268 = vrot.lane.b32.xlu0 %v264, 126
        %v269 = vpop.permute.xlu0 %268
        %270 = vrot.lane.b32.xlu0 %v265, 126
        %v271 = vpop.permute.xlu0 %270
        %274 = vrot.lane.b32.xlu0 %v264, 124
        %v275 = vpop.permute.xlu0 %274
        %276 = vrot.lane.b32.xlu0 %v265, 124
        %v277 = vpop.permute.xlu0 %276
        %v280 = vld [vmem:[#allocation5] sm:$0xff]
        %v281 = vld [vmem:[#allocation5 + $0x8] sm:$0xff]
        %v282 = vld [vmem:[#allocation5 + $0x10] sm:$0xff]
        %v283 = vld [vmem:[#allocation5 + $0x18] sm:$0xff]
        %v284 = vld [vmem:[%s3] sm:$0xff]
        %v285 = vld [vmem:[%s3 + $0x8] sm:$0xff]
        %v286 = vld [vmem:[%s3 + $0x10] sm:$0xff]
        %v287 = vld [vmem:[%s3 + $0x18] sm:$0xff]
        %289 = vset.pattern.permute.xlu0 0
        %290 = vperm.xlu0 %289, %v284
        %v291 = vpop.permute.xlu0 %290
        %294 = vset.pattern.permute.xlu0 0
        %295 = vperm.xlu0 %294, %v285
        %v296 = vpop.permute.xlu0 %295
        %299 = vset.pattern.permute.xlu0 0
        %300 = vperm.xlu0 %299, %v286
        %v301 = vpop.permute.xlu0 %300
        %304 = vset.pattern.permute.xlu0 0
        %305 = vperm.xlu0 %304, %v287
        %v306 = vpop.permute.xlu0 %305
        %vm308 = vcmask 392192
        %v310 = vsel %vm308, %v280, 0
        %v313 = vsel %vm308, %v281, 0
        %v316 = vsel %vm308, %v282, 0
        %v319 = vsel %vm308, %v283, 0
        %321 = vmatprep.subr.mxu0 0.0
        %322 = vmatpush1.msra.mxu0 %v264
        %323 = vmatprep.subr.mxu0 0.0
        %324 = vmatpush1.msra.mxu0 %v265
        %325 = vmatprep.subr.mxu0 0.0
        %326 = vmatpush1.msra.mxu0 %v269
        %327 = vmatprep.subr.mxu0 0.0
        %328 = vmatpush1.msra.mxu0 %v271
        %329 = vmatprep.subr.mxu0 0.0
        %330 = vmatpush1.msra.mxu0 %v275
        %331 = vmatprep.subr.mxu0 0.0
        %332 = vmatpush1.msra.mxu0 %v277
        %333 = vmatprep.subr.mxu0 0.0
        %334 = vmatpush1.msra.mxu0 0.0
        %335 = vmatprep.subr.mxu0 0.0
        %336 = vmatpush1.msra.mxu0 0.0
        %337 = vmatprep.subr.mxu0 0.0
        %338 = vmatpush1.msra.mxu0 0.0
        %339 = vmatprep.subr.mxu0 0.0
        %340 = vmatpush1.msra.mxu0 0.0
        %341 = vmatprep.subr.mxu0 0.0
        %342 = vmatpush1.msra.mxu0 0.0
        %343 = vmatprep.subr.mxu0 0.0
        %344 = vmatpush1.msra.mxu0 0.0
        %345 = vmatprep.subr.mxu0 0.0
        %346 = vmatpush1.msra.mxu0 0.0
        %347 = vmatprep.subr.mxu0 0.0
        %348 = vmatpush1.msra.mxu0 0.0
        %349 = vmatprep.subr.mxu0 0.0
        %350 = vmatpush1.msra.mxu0 0.0
        %351 = vmatprep.subr.mxu0 0.0
        %352 = vmatpush1.msra.mxu0 0.0
        %353 = vmatprep.subr.mxu0 0.0
        %354 = vmatpush1.msra.mxu0 0.0
        %355 = vmatprep.subr.mxu0 0.0
        %356 = vmatpush1.msra.mxu0 0.0
        %357 = vmatprep.subr.mxu0 0.0
        %358 = vmatpush1.msra.mxu0 0.0
        %359 = vmatprep.subr.mxu0 0.0
        %360 = vmatpush1.msra.mxu0 0.0
        %361 = vmatprep.subr.mxu0 0.0
        %362 = vmatpush1.msra.mxu0 0.0
        %363 = vmatprep.subr.mxu0 0.0
        %364 = vmatpush1.msra.mxu0 0.0
        %365 = vmatprep.subr.mxu0 0.0
        %366 = vmatpush1.msra.mxu0 0.0
        %367 = vmatprep.subr.mxu0 0.0
        %368 = vmatpush1.msra.mxu0 0.0
        %369 = vmatprep.subr.mxu0 0.0
        %370 = vmatpush1.msra.mxu0 0.0
        %371 = vmatprep.subr.mxu0 0.0
        %372 = vmatpush1.msra.mxu0 0.0
        %373 = vmatprep.subr.mxu0 0.0
        %374 = vmatpush1.msra.mxu0 0.0
        %375 = vmatprep.subr.mxu0 0.0
        %376 = vmatpush1.msra.mxu0 0.0
        %377 = vmatprep.subr.mxu0 0.0
        %378 = vmatpush1.msra.mxu0 0.0
        %379 = vmatprep.subr.mxu0 0.0
        %380 = vmatpush1.msra.mxu0 0.0
        %381 = vmatprep.subr.mxu0 0.0
        %382 = vmatpush1.msra.mxu0 0.0
        %383 = vmatprep.subr.mxu0 0.0
        %384 = vmatpush1.msra.mxu0 0.0
        %385 = vmatprep.mubr.f32.mxu0 0.0
        %386 = vmatmul.mubr.f32.gmra.mrb[0].mxu0 %v310
        %v387 = vpop.f32.mrb[0].mxu0
        %v388 = vadd.f32 %v291, %v387
        %v389 = vpop.f32.mrb[0].mxu0
        %390 = vmatprep.mubr.f32.mxu0 0.0
        %391 = vmatmul.mubr.f32.gmra.mrb[0].mxu0 %v313
        %v392 = vpop.f32.mrb[0].mxu0
        %v393 = vadd.f32 %v296, %v392
        %v394 = vpop.f32.mrb[0].mxu0
        %395 = vmatprep.mubr.f32.mxu0 0.0
        %396 = vmatmul.mubr.f32.gmra.mrb[0].mxu0 %v316
        %v397 = vpop.f32.mrb[0].mxu0
        %v398 = vadd.f32 %v301, %v397
        %v399 = vpop.f32.mrb[0].mxu0
        %400 = vmatprep.mubr.f32.mxu0 0.0
        %401 = vmatmul.mubr.f32.gmra.mrb[0].mxu0 %v319
        %v402 = vpop.f32.mrb[0].mxu0
        %v403 = vadd.f32 %v306, %v402
        %v404 = vpop.f32.mrb[0].mxu0
        %405 = vdwg.mxu0
        %v406 = vtanh.pop %v388
        %v407 = vtanh.pop %v393
        %v408 = vmul.f32 %v398, 0.5
        %v409 = vmul.f32 %v403, 0.5
        %v410 = vtanh.pop %v408
        %v411 = vtanh.pop %v409
        %v412 = vadd.f32 %v410, 1.0
        %v413 = vadd.f32 %v411, 1.0
        %v414 = vmul.f32 %v412, 0.5
        %v415 = vmul.f32 %v413, 0.5
        %v416 = vmul.f32 %v406, %v414
        %v417 = vmul.f32 %v407, %v415
        %vm418 = vcmask 228352
        %419 = vst.msk [vmem:[%s245] sm:$0xff] %vm418, %v416
        %420 = vst.msk [vmem:[%s245 + $0x8] sm:$0xff] %vm418, %v417
        %s421 = sand.u32 %s124, 1
        %s422 = scalar_lea.sflag [#allocation4], %s421
        %s423 = sand.u32 %s124, 1
        %s424 = smul.addr %s423, 16
        %s425 = scalar_lea.vmem [#allocation7], %s424
        // Predicated region
        $region45: #{tpu_custom_call.1} parent=35 // pred_check
          %p426 = pneg %p134
        $region46: #{tpu_custom_call.1} parent=35 // pred_check_branch
          %428 = sbr.rel (%p426) target = $region48
        $region47: #{tpu_custom_call.1} parent=35 // pred_region
          %s430 = ssub.s32 256, 256
          %431 = vsyncadd %s422, %s430
          %s432 = smul.addr %s22, 2
          %s433 = smul.addr %s432, 128
          %s434 = scalar_lea.hbm %s4, %s433
          %s435 = sshll.u32 %s425, 4
          %s436 = int_to_ptr.vmem [resolvable:$true] %s435
          %441 = dma.vmem_to_hbm [thread:$0]  %s436, 256, %s434, %s422, 128, 128, 8
        $region48: #{tpu_custom_call.1} parent=35 // pred_fallthru
          _
      $region36: #{tpu_custom_call.1} parent=5 // pred_fallthru
        _
      %p442 = scmp.le.s32.totalorder 2, %s17
      // Predicated region
      $region49: #{tpu_custom_call.1} parent=5 // pred_check
        %p443 = pneg %p442
      $region50: #{tpu_custom_call.1} parent=5 // pred_check_branch
        %445 = sbr.rel (%p443) target = $region52
      $region51: #{tpu_custom_call.1} parent=5 // pred_region
        %s446 = ssub.s32 %s17, 2
        // Predicated region
        $region53: #{tpu_custom_call.1} parent=51 // pred_check
          %p447 = pneg %p140
        $region54: #{tpu_custom_call.1} parent=51 // pred_check_branch
          %449 = sbr.rel (%p447) target = $region56
        $region55: #{tpu_custom_call.1} parent=51 // pred_region
          %s450 = sand.u32 %s125, 1
          %s451 = scalar_lea.sflag [#allocation4], %s450
          %s452 = sand.u32 %s125, 1
          %s453 = smul.addr %s452, 16
          %s454 = scalar_lea.vmem [#allocation7], %s453
          %455 = dma.done %s451, 256
        $region56: #{tpu_custom_call.1} parent=51 // pred_fallthru
          _
      $region52: #{tpu_custom_call.1} parent=5 // pred_fallthru
        _
    $region6: #{tpu_custom_call.1} parent=1 // loop_footer
      %s21 = sadd.s32 1, %s17
    $region7: #{tpu_custom_call.1} parent=1 // loop_footer_branch
      %16 = sbr.rel target = $region3
    $region8: #{tpu_custom_call.1} parent=1 // loop_exit
      _
    %456 = vsyncpa [#allocation3], 1
    %s457 = scalar_lea.sflag [#allocation3], 1
    %458 = vsyncpa %s457, 1
    %459 = vsyncpa [#allocation6], 1
    %460 = vsyncpa [#allocation4], 1
    %s461 = scalar_lea.sflag [#allocation4], 1
    %462 = vsyncpa %s461, 1

</llo_original>
